<compile_context>
chip_gen: v7x
topology: tpu7x:2x2x1
jax: 0.10.0
libtpu: 0.0.40
codegen_flags: <defaults>
</compile_context>

<pallas_src>
import functools

import jax
import jax.numpy as jnp
from jax.experimental import pallas as pl
from jax.experimental.pallas import tpu as pltpu


def _early_regu_kernel(x_ref, pc_ref, pre_hc_ref, loss_ref, new_hc_ref, acc_ref,
                       *, batch, tile_b):
    pid = pl.program_id(0)

    @pl.when(pid == 0)
    def _init():
        acc_ref[...] = jnp.zeros_like(acc_ref)
        # loss = sum(Pc * log10(Pc / pre_hc)) does not depend on x -> run once.
        pc = pc_ref[...].astype(jnp.float32)
        pre = pre_hc_ref[...].astype(jnp.float32)
        inv_ln10 = jnp.float32(0.4342944819032518)
        loss = jnp.sum(pc * jnp.log(pc / pre)) * inv_ln10
        loss_ref[...] = jnp.full((1, 1), loss, dtype=loss_ref.dtype)

    # Numerically-stable row-wise softmax on this batch tile.
    x = x_ref[...].astype(jnp.float32)
    m = jnp.max(x, axis=1, keepdims=True)
    e = jnp.exp(x - m)
    denom = jnp.sum(e, axis=1, keepdims=True)
    soft = e * pl.reciprocal(denom)  # exact (approx=False) to keep 1e-5 tolerance

    if batch % tile_b != 0:
        # Mask garbage rows of the padded final tile before accumulating.
        row = pid * tile_b + jax.lax.broadcasted_iota(jnp.int32, soft.shape, 0)
        soft = jnp.where(row < batch, soft, jnp.float32(0.0))

    acc_ref[...] += jnp.sum(soft, axis=0, keepdims=True)

    @pl.when(pid == pl.num_programs(0) - 1)
    def _finalize():
        new_hc_ref[...] = (acc_ref[...] * jnp.float32(1.0 / batch)).astype(
            new_hc_ref.dtype
        )


def _pick_batch_tile(batch, num_classes):
    # ~8 MiB per f32 input tile -> ~16 MiB double-buffered; safe headroom on
    # v5e/v6e (128 MiB VMEM) and v7x (64 MiB per TC).
    tile_bytes = 8 * 1024 * 1024
    max_rows = max(8, tile_bytes // max(1, num_classes * 4))
    tb = min(batch, max_rows)
    if tb < batch:
        tb = max(8, (tb // 8) * 8)  # keep sublane-aligned block shape
    return tb


def early_regu_call(x, pc, pre_hc, tile_b=None):
    B, C = x.shape
    tb = tile_b if tile_b is not None else _pick_batch_tile(B, C)
    tb = min(tb, B)
    grid = (pl.cdiv(B, tb),)
    kernel = functools.partial(_early_regu_kernel, batch=B, tile_b=tb)
    loss, new_hc = pl.pallas_call(
        kernel,
        grid=grid,
        out_shape=(
            jax.ShapeDtypeStruct((1, 1), jnp.float32),
            jax.ShapeDtypeStruct((1, C), jnp.float32),
        ),
        in_specs=[
            pl.BlockSpec((tb, C), lambda i: (i, 0)),
            pl.BlockSpec((1, C), lambda i: (0, 0)),
            pl.BlockSpec((1, C), lambda i: (0, 0)),
        ],
        out_specs=(
            pl.BlockSpec((1, 1), lambda i: (0, 0)),
            pl.BlockSpec((1, C), lambda i: (0, 0)),
        ),
        scratch_shapes=[pltpu.VMEM((1, C), jnp.float32)],
        compiler_params=pltpu.CompilerParams(
            dimension_semantics=("arbitrary",),  # batch axis is a reduction
            vmem_limit_bytes=48 * 1024 * 1024,
        ),
    )(x, pc, pre_hc)
    return loss, new_hc


class EarlyRegu:
    """JAX/Pallas port of the stateful PyTorch earlyRegu module."""

    def __init__(self, num_classes, tile_b=None):
        self.num_classes = num_classes
        self.tile_b = tile_b
        # Deterministic parameter init: Pc = 1/num_classes * ones(1, num_classes)
        self.Pc = jnp.full((1, num_classes), 1.0 / num_classes, dtype=jnp.float32)
        self.init = True
        self.pre_hc = None

    def __call__(self, output):
        if self.init:
            # First call: only the new pre_hc state is needed; the kernel's loss
            # output is ignored. Use a ones dummy pre_hc to keep the log finite.
            dummy = jnp.ones((1, self.num_classes), dtype=jnp.float32)
            _, new_hc = early_regu_call(output, self.Pc, dummy, tile_b=self.tile_b)
            self.pre_hc = new_hc
            self.init = False
            return jnp.zeros((1,), dtype=jnp.float32)
        else:
            loss, new_hc = early_regu_call(output, self.Pc, self.pre_hc,
                                           tile_b=self.tile_b)
            self.pre_hc = new_hc
            return loss[0, 0]  # 0-dim scalar, matching torch.sum(...)


def _reference(output, pc, pre_hc):
    soft = jax.nn.softmax(output.astype(jnp.float32), axis=1)
    new_hc = jnp.sum(soft, axis=0, keepdims=True) / output.shape[0]
    loss = jnp.sum(pc * (jnp.log(pc / pre_hc) / jnp.log(10.0)))
    return loss, new_hc


if __name__ == "__main__":
    num_classes = 16
    batch = 8

    key = jax.random.PRNGKey(0)
    k1, k2 = jax.random.split(key)
    logits_0 = jax.random.normal(k1, (batch, num_classes), dtype=jnp.float32)
    logits_1 = jax.random.normal(k2, (batch, num_classes), dtype=jnp.float32)

    regu = EarlyRegu(num_classes)

    # First call: init path, returns zeros(1) and stores pre_hc.
    out0 = jax.block_until_ready(regu(logits_0))
    pre_hc_after_first = jax.block_until_ready(regu.pre_hc)

    # Second call: computes the KL-like loss against the stored pre_hc.
    out1 = jax.block_until_ready(regu(logits_1))

    # Cross-check against a pure-JAX reference.
    ref_loss0, ref_hc0 = _reference(logits_0, regu.Pc, jnp.ones((1, num_classes)))
    ref_loss1, ref_hc1 = _reference(logits_1, regu.Pc, ref_hc0)

    assert out0.shape == (1,) and float(out0[0]) == 0.0
    assert jnp.allclose(pre_hc_after_first, ref_hc0, atol=1e-5, rtol=1e-5)
    assert jnp.allclose(out1, ref_loss1, atol=1e-5, rtol=1e-5)
    assert jnp.allclose(regu.pre_hc, ref_hc1, atol=1e-5, rtol=1e-5)

    # Exercise the batch-tiled path: grid > 1 with a masked partial last tile.
    B2, C2 = 20, 16
    logits_2 = jax.random.normal(jax.random.PRNGKey(3), (B2, C2), dtype=jnp.float32)
    pc2 = jnp.full((1, C2), 1.0 / C2, dtype=jnp.float32)
    pre2 = jnp.abs(jax.random.normal(jax.random.PRNGKey(4), (1, C2),
                                     dtype=jnp.float32)) + 0.1
    loss2, hc2 = early_regu_call(logits_2, pc2, pre2, tile_b=8)
    loss2, hc2 = jax.block_until_ready((loss2, hc2))
    ref_loss2, ref_hc2 = _reference(logits_2, pc2, pre2)
    assert jnp.allclose(loss2[0, 0], ref_loss2, atol=1e-5, rtol=1e-5)
    assert jnp.allclose(hc2, ref_hc2, atol=1e-5, rtol=1e-5)

    print("KERNEL_OK")
</pallas_src>

<mosaic_0001>
module attributes {stable_mosaic.version = 11 : i64} {
  func.func @_early_regu_kernel(%arg0: i32, %arg1: memref<8x16xf32, #tpu.memory_space<vmem>>, %arg2: memref<1x16xf32, #tpu.memory_space<vmem>>, %arg3: memref<1x16xf32, #tpu.memory_space<vmem>>, %arg4: memref<1x1xf32, #tpu.memory_space<vmem>>, %arg5: memref<1x16xf32, #tpu.memory_space<vmem>>, %arg6: memref<1x16xf32, #tpu.memory_space<vmem>>) attributes {dimension_semantics = [#tpu.dimension_semantics<arbitrary>], iteration_bounds = array<i64: 1>, scalar_prefetch = 0 : i64, scratch_operands = 1 : i64, tpu.core_type = #tpu.core_type<tc>, window_params = [{transform_indices = @transform_0, window_bounds = array<i64: 8, 16>}, {pipeline_mode = #tpu.pipeline_mode<synchronous>, transform_indices = @transform_1, window_bounds = array<i64: 1, 16>}, {pipeline_mode = #tpu.pipeline_mode<synchronous>, transform_indices = @transform_2, window_bounds = array<i64: 1, 16>}, {pipeline_mode = #tpu.pipeline_mode<synchronous>, transform_indices = @transform_3, window_bounds = array<i64: 1, 1>}, {pipeline_mode = #tpu.pipeline_mode<synchronous>, transform_indices = @transform_4, window_bounds = array<i64: 1, 16>}]} {
    %c0_i32 = arith.constant 0 : i32
    %0 = arith.cmpi eq, %arg0, %c0_i32 : i32
    %1 = arith.extui %0 : i1 to i32
    %c0_i32_0 = arith.constant 0 : i32
    %2 = arith.cmpi ne, %1, %c0_i32_0 : i32
    scf.if %2 {
      %cst_10 = arith.constant 0.000000e+00 : f32
      %22 = vector.broadcast %cst_10 : f32 to vector<1x16xf32>
      %c0_11 = arith.constant 0 : index
      %c0_12 = arith.constant 0 : index
      %23 = vector.load %arg6[%c0_11, %c0_12] : memref<1x16xf32, #tpu.memory_space<vmem>>, vector<1x16xf32>
      tpu.vector_store %arg6[%c0_11, %c0_12], %22 {strides = array<i32>} : memref<1x16xf32, #tpu.memory_space<vmem>>, vector<1x16xf32>,
      %c0_13 = arith.constant 0 : index
      %c0_14 = arith.constant 0 : index
      %24 = vector.load %arg2[%c0_13, %c0_14] : memref<1x16xf32, #tpu.memory_space<vmem>>, vector<1x16xf32>
      %c0_15 = arith.constant 0 : index
      %c0_16 = arith.constant 0 : index
      %25 = vector.load %arg3[%c0_15, %c0_16] : memref<1x16xf32, #tpu.memory_space<vmem>>, vector<1x16xf32>
      %26 = arith.divf %24, %25 : vector<1x16xf32>
      %27 = math.log %26 : vector<1x16xf32>
      %28 = arith.mulf %24, %27 : vector<1x16xf32>
      %29 = vector.shape_cast %28 : vector<1x16xf32> to vector<1x1x16xf32>
      %cst_17 = arith.constant dense<0.000000e+00> : vector<1xf32>
      %30 = vector.multi_reduction <add>, %29, %cst_17 [1, 2] : vector<1x1x16xf32> to vector<1xf32>
      %31 = vector.shape_cast %30 : vector<1xf32> to vector<1x1x1xf32>
      %32 = vector.extract %31[0, 0, 0] : f32 from vector<1x1x1xf32>
      %cst_18 = arith.constant 0.434294492 : f32
      %33 = arith.mulf %32, %cst_18 : f32
      %34 = vector.broadcast %33 : f32 to vector<1x1xf32>
      %c0_19 = arith.constant 0 : index
      %c0_20 = arith.constant 0 : index
      %35 = vector.load %arg4[%c0_19, %c0_20] : memref<1x1xf32, #tpu.memory_space<vmem>>, vector<1x1xf32>
      tpu.vector_store %arg4[%c0_19, %c0_20], %34 {strides = array<i32>} : memref<1x1xf32, #tpu.memory_space<vmem>>, vector<1x1xf32>,
    } else {
    }
    %c0 = arith.constant 0 : index
    %c0_1 = arith.constant 0 : index
    %3 = vector.load %arg1[%c0, %c0_1] : memref<8x16xf32, #tpu.memory_space<vmem>>, vector<8x16xf32>
    %cst = arith.constant dense<0xFF800000> : vector<8xf32>
    %4 = vector.multi_reduction <maximumf>, %3, %cst [1] : vector<8x16xf32> to vector<8xf32>
    %5 = vector.shape_cast %4 : vector<8xf32> to vector<8x1xf32>
    %6 = vector.broadcast %5 : vector<8x1xf32> to vector<8x16xf32>
    %7 = arith.subf %3, %6 : vector<8x16xf32>
    %8 = math.exp %7 : vector<8x16xf32>
    %cst_2 = arith.constant dense<0.000000e+00> : vector<8xf32>
    %9 = vector.multi_reduction <add>, %8, %cst_2 [1] : vector<8x16xf32> to vector<8xf32>
    %10 = vector.shape_cast %9 : vector<8xf32> to vector<8x1xf32>
    %11 = tpu.reciprocal %10 : vector<8x1xf32> -> vector<8x1xf32>
    %12 = vector.broadcast %11 : vector<8x1xf32> to vector<8x16xf32>
    %13 = arith.mulf %8, %12 : vector<8x16xf32>
    %c0_3 = arith.constant 0 : index
    %c0_4 = arith.constant 0 : index
    %14 = vector.load %arg6[%c0_3, %c0_4] : memref<1x16xf32, #tpu.memory_space<vmem>>, vector<1x16xf32>
    %cst_5 = arith.constant dense<0.000000e+00> : vector<16xf32>
    %15 = vector.multi_reduction <add>, %13, %cst_5 [0] : vector<8x16xf32> to vector<16xf32>
    %16 = vector.shape_cast %15 : vector<16xf32> to vector<1x16xf32>
    %17 = arith.addf %14, %16 : vector<1x16xf32>
    %c0_6 = arith.constant 0 : index
    %c0_7 = arith.constant 0 : index
    %18 = vector.load %arg6[%c0_6, %c0_7] : memref<1x16xf32, #tpu.memory_space<vmem>>, vector<1x16xf32>
    tpu.vector_store %arg6[%c0_6, %c0_7], %17 {strides = array<i32>} : memref<1x16xf32, #tpu.memory_space<vmem>>, vector<1x16xf32>,
    %c0_i32_8 = arith.constant 0 : i32
    %19 = arith.cmpi eq, %arg0, %c0_i32_8 : i32
    %20 = arith.extui %19 : i1 to i32
    %c0_i32_9 = arith.constant 0 : i32
    %21 = arith.cmpi ne, %20, %c0_i32_9 : i32
    scf.if %21 {
      %c0_10 = arith.constant 0 : index
      %c0_11 = arith.constant 0 : index
      %22 = vector.load %arg6[%c0_10, %c0_11] : memref<1x16xf32, #tpu.memory_space<vmem>>, vector<1x16xf32>
      %cst_12 = arith.constant 1.250000e-01 : f32
      %23 = vector.broadcast %cst_12 : f32 to vector<1x16xf32>
      %24 = arith.mulf %22, %23 : vector<1x16xf32>
      %c0_13 = arith.constant 0 : index
      %c0_14 = arith.constant 0 : index
      %25 = vector.load %arg5[%c0_13, %c0_14] : memref<1x16xf32, #tpu.memory_space<vmem>>, vector<1x16xf32>
      tpu.vector_store %arg5[%c0_13, %c0_14], %24 {strides = array<i32>} : memref<1x16xf32, #tpu.memory_space<vmem>>, vector<1x16xf32>,
    } else {
    }
    return
  }
  func.func @transform_0(%arg0: i32) -> (i32, i32) {
    %c0_i32 = arith.constant 0 : i32
    %c0_i32_0 = arith.constant 0 : i32
    return %arg0, %c0_i32 : i32, i32
  }
  func.func @transform_1(%arg0: i32) -> (i32, i32) {
    %c0_i32 = arith.constant 0 : i32
    %c0_i32_0 = arith.constant 0 : i32
    %c0_i32_1 = arith.constant 0 : i32
    return %c0_i32, %c0_i32_0 : i32, i32
  }
  func.func @transform_2(%arg0: i32) -> (i32, i32) {
    %c0_i32 = arith.constant 0 : i32
    %c0_i32_0 = arith.constant 0 : i32
    %c0_i32_1 = arith.constant 0 : i32
    return %c0_i32, %c0_i32_0 : i32, i32
  }
  func.func @transform_3(%arg0: i32) -> (i32, i32) {
    %c0_i32 = arith.constant 0 : i32
    %c0_i32_0 = arith.constant 0 : i32
    %c0_i32_1 = arith.constant 0 : i32
    return %c0_i32, %c0_i32_0 : i32, i32
  }
  func.func @transform_4(%arg0: i32) -> (i32, i32) {
    %c0_i32 = arith.constant 0 : i32
    %c0_i32_0 = arith.constant 0 : i32
    %c0_i32_1 = arith.constant 0 : i32
    return %c0_i32, %c0_i32_0 : i32, i32
  }
}

</mosaic_0001>

<llo_original>
// kernel: tpu_custom_call.1
$region0: #{tpu_custom_call.1}
  #allocation0 [shape = 'u32[]', space=smem, size = 0x4, offset = 0x4, fixed_abs, tag = 'smem constant byte address 0x4 - core index']
  #allocation1 [shape = 'u32[144,128]{1,0:T(1,128)}', space=vmem, size = 0x12000, scoped, tag = 'internal scratch']
  #allocation2 [shape = 'f32[1,16]{1,0:T(1,128)}', space=vmem, size = 0x200, scoped, tag = 'scratch operand']
  %s0 = inlined_call_operand.hbm [shape: f32[8,16], index: 0, kind: input, shape index: {}]
  %s1 = inlined_call_operand.vmem [shape: f32[1,16], index: 1, kind: input, shape index: {}]
  %s2 = inlined_call_operand.vmem [shape: f32[1,16], index: 2, kind: input, shape index: {}]
  %s3 = inlined_call_operand.hbm [shape: f32[1,1], index: 3, kind: output, shape index: {0}]
  %s4 = inlined_call_operand.hbm [shape: f32[1,16], index: 4, kind: output, shape index: {1}]
  %5 = xla_tuple %s3, %s4
  %s6 = sld [smem:[#allocation0]]
  $region42: #{tpu_custom_call.1} parent=0
    _
  %s8 = ssub.s32 1, %s6
  %s9 = scalar_select 0, %s8, %s6
  $region1: #{tpu_custom_call.1} parent=0
    #allocation3 [shape = 'u8[4096]{0}', space=vmem, size = 0x1000, scoped, tag = 'input window, operand 0, single buffered']
    #allocation4 [shape = 's32[1]{0}', space=sflag, size = 0x4, scoped, tag = 'scoped memory for tpu_custom_call.1']
    #allocation5 [shape = 's32[1]{0}', space=sflag, size = 0x4, scoped, tag = 'scoped memory for tpu_custom_call.1']
    #allocation6 [shape = 'u8[512]{0}', space=vmem, size = 0x400, scoped, tag = 'output window, operand 0, single buffered']
    #allocation7 [shape = 'u8[512]{0}', space=vmem, size = 0x400, scoped, tag = 'output window, operand 1, single buffered']
    #allocation8 [shape = 's32[1]{0}', space=sflag, size = 0x4, scoped, tag = 'scoped memory for tpu_custom_call.1']
    %10 = vsyncpa [#allocation4], 0
    %11 = vsyncpa [#allocation5], 0
    %12 = vsyncpa [#allocation8], 0
    // Predicated region
    $region2: #{tpu_custom_call.1} parent=1 // pred_check
      _
    $region3: #{tpu_custom_call.1} parent=1 // pred_check_branch
      %14 = sbr.rel (0) target = $region5
    $region4: #{tpu_custom_call.1} parent=1 // pred_region
      %s16 = ssub.s32 128, 128
      %17 = vsyncadd [#allocation4], %s16
      %s19 = sshll.u32 [#allocation3], 4
      %s20 = int_to_ptr.vmem [resolvable:$true] %s19
      %22 = dma.hbm_to_vmem [thread:$0]  %s0, 128, %s20, [#allocation4]
    $region5: #{tpu_custom_call.1} parent=1 // pred_fallthru
      _
    // Predicated region
    $region6: #{tpu_custom_call.1} parent=1 // pred_check
      _
    $region7: #{tpu_custom_call.1} parent=1 // pred_check_branch
      %24 = sbr.rel (0) target = $region9
    $region8: #{tpu_custom_call.1} parent=1 // pred_region
      _
    $region9: #{tpu_custom_call.1} parent=1 // pred_fallthru
      _
    // Predicated region
    $region10: #{tpu_custom_call.1} parent=1 // pred_check
      _
    $region11: #{tpu_custom_call.1} parent=1 // pred_check_branch
      %26 = sbr.rel (0) target = $region13
    $region12: #{tpu_custom_call.1} parent=1 // pred_region
      _
    $region13: #{tpu_custom_call.1} parent=1 // pred_fallthru
      _
    // Predicated region
    $region14: #{tpu_custom_call.1} parent=1 // pred_check
      _
    $region15: #{tpu_custom_call.1} parent=1 // pred_check_branch
      %28 = sbr.rel (0) target = $region17
    $region16: #{tpu_custom_call.1} parent=1 // pred_region
      %29 = dma.done [#allocation4], 128
    $region17: #{tpu_custom_call.1} parent=1 // pred_fallthru
      _
    %p30 = scmp.eq.s32.totalorder 0, 0
    // Predicated region
    $region18: #{tpu_custom_call.1} parent=1 // pred_check
      %p31 = pneg %p30
    $region19: #{tpu_custom_call.1} parent=1 // pred_check_branch
      %33 = sbr.rel (%p31) target = $region21
    $region20: #{tpu_custom_call.1} parent=1 // pred_region
      %vm34 = vcmask 122880
      %35 = vst.msk [vmem:[#allocation2] sm:$0x1] %vm34, 0.0
      %v36 = vld [vmem:[%s1] sm:$0x1]
      %v37 = vld [vmem:[%s2] sm:$0x1]
      %v38 = vrcp.pop %v37
      %v39 = vmul.f32 %v36, %v38
      %v40 = vlog2.pop %v39
      %v41 = vmul.f32 %v40, 0.6931472
      %v42 = vmul.f32 %v36, %v41
      %v43 = vsel %vm34, %v42, 0.0
      %44 = vadd.xlane.f32.xlu0 %v43
      %v45 = vpop.xlane.xlu0 %44
      %v46 = vrot.slane %v45, 4
      %v47 = vadd.f32 %v45, %v46
      %v48 = vrot.slane %v47, 2
      %v49 = vadd.f32 %v47, %v48
      %v50 = vrot.slane %v49, 1
      %v51 = vadd.f32 %v49, %v50
      %s52 = vtos %v51
      %s53 = smul.f32 %s52, 0.4342945
      %v54 = vstv %s53
      %vm55 = vcmask 0
      %56 = vst.msk [vmem:[#allocation6] sm:$0x1] %vm55, %v54
    $region21: #{tpu_custom_call.1} parent=1 // pred_fallthru
      _
    %v57 = vld [vmem:[#allocation3] sm:$0xff]
    %vm58 = vcmask 130048
    %v59 = vsel %vm58, %v57, -inf
    %60 = vmax.xlane.f32.xlu0 %v59
    %v61 = vpop.xlane.xlu0 %60
    %v62 = vsub.f32 %v57, %v61
    %v63 = vmul.f32 %v62, 1.442695
    %v64 = vpow.pop %v63
    %v65 = vsel %vm58, %v64, 0.0
    %66 = vadd.xlane.f32.xlu0 %v65
    %v67 = vpop.xlane.xlu0 %66
    %v68 = vrcp.pop %v67
    %v69 = vmul.f32 %v64, %v68
    %v70 = vld [vmem:[#allocation2] sm:$0x1]
    %v71 = vsel %vm58, %v69, 0.0
    %v72 = vrot.slane %v71, 4
    %v73 = vadd.f32 %v71, %v72
    %v74 = vrot.slane %v73, 2
    %v75 = vadd.f32 %v73, %v74
    %v76 = vrot.slane %v75, 1
    %v77 = vadd.f32 %v75, %v76
    %v78 = vadd.f32 %v70, %v77
    %vm79 = vcmask 122880
    %80 = vst.msk [vmem:[#allocation2] sm:$0x1] %vm79, %v78
    // Predicated region
    $region22: #{tpu_custom_call.1} parent=1 // pred_check
      %p81 = pneg %p30
    $region23: #{tpu_custom_call.1} parent=1 // pred_check_branch
      %83 = sbr.rel (%p81) target = $region25
    $region24: #{tpu_custom_call.1} parent=1 // pred_region
      %v84 = vld [vmem:[#allocation2] sm:$0x1]
      %v85 = vmul.f32 %v84, 0.125
      %86 = vst.msk [vmem:[#allocation7] sm:$0x1] %vm79, %v85
    $region25: #{tpu_custom_call.1} parent=1 // pred_fallthru
      _
    // Predicated region
    $region26: #{tpu_custom_call.1} parent=1 // pred_check
      _
    $region27: #{tpu_custom_call.1} parent=1 // pred_check_branch
      %88 = sbr.rel (0) target = $region29
    $region28: #{tpu_custom_call.1} parent=1 // pred_region
      %s90 = ssub.s32 16, 16
      %91 = vsyncadd [#allocation5], %s90
      %s93 = sshll.u32 [#allocation6], 4
      %s94 = int_to_ptr.vmem [resolvable:$true] %s93
      %96 = dma.vmem_to_hbm [thread:$0]  %s94, 16, %s3, [#allocation5]
    $region29: #{tpu_custom_call.1} parent=1 // pred_fallthru
      _
    // Predicated region
    $region30: #{tpu_custom_call.1} parent=1 // pred_check
      _
    $region31: #{tpu_custom_call.1} parent=1 // pred_check_branch
      %98 = sbr.rel (0) target = $region33
    $region32: #{tpu_custom_call.1} parent=1 // pred_region
      %s100 = ssub.s32 16, 16
      %101 = vsyncadd [#allocation8], %s100
      %s103 = sshll.u32 [#allocation7], 4
      %s104 = int_to_ptr.vmem [resolvable:$true] %s103
      %106 = dma.vmem_to_hbm [thread:$0]  %s104, 16, %s4, [#allocation8]
    $region33: #{tpu_custom_call.1} parent=1 // pred_fallthru
      _
    // Predicated region
    $region34: #{tpu_custom_call.1} parent=1 // pred_check
      _
    $region35: #{tpu_custom_call.1} parent=1 // pred_check_branch
      %108 = sbr.rel (0) target = $region37
    $region36: #{tpu_custom_call.1} parent=1 // pred_region
      %109 = dma.done [#allocation5], 16
    $region37: #{tpu_custom_call.1} parent=1 // pred_fallthru
      _
    // Predicated region
    $region38: #{tpu_custom_call.1} parent=1 // pred_check
      _
    $region39: #{tpu_custom_call.1} parent=1 // pred_check_branch
      %111 = sbr.rel (0) target = $region41
    $region40: #{tpu_custom_call.1} parent=1 // pred_region
      %112 = dma.done [#allocation8], 16
    $region41: #{tpu_custom_call.1} parent=1 // pred_fallthru
      _
    %113 = vsyncpa [#allocation4], 1
    %114 = vsyncpa [#allocation5], 1
    %115 = vsyncpa [#allocation8], 1

</llo_original>
